<compile_context>
chip_gen: v7x
topology: tpu7x:2x2x1
jax: 0.10.0
libtpu: 0.0.40
codegen_flags: <defaults>
</compile_context>

<pallas_src>
import functools

import jax
import jax.numpy as jnp
from jax.experimental import pallas as pl
from jax.experimental.pallas import tpu as pltpu

_SUBLANE = 8  # f32 sublane count


def _round_up(x, m):
    return (x + m - 1) // m * m


def _linear_kernel(x_ref, wt_ref, b_ref, o_ref, *, apply_sigmoid):
    # x: [TB, d_in], wt: [d_in, d_out] (pre-transposed once), b: [1, d_out]
    z = jnp.dot(x_ref[...], wt_ref[...], preferred_element_type=jnp.float32)
    z = z + b_ref[...]
    if apply_sigmoid:
        # Fused logistic activation rides the EUP slot; hidden under the
        # memory pipeline, so effectively free in-kernel.
        z = jax.nn.sigmoid(z)
    o_ref[...] = z.astype(o_ref.dtype)


def prepare_params(weight, bias):
    """One-time param prep: transpose torch-layout weight [d_out, d_in] to a
    lane-dense [d_in, d_out] and reshape bias to [1, d_out].

    Call this at init time; reuse the result across forward calls.
    """
    w_t = jnp.transpose(weight)             # [d_in, d_out]
    b_row = jnp.reshape(bias, (1, -1))      # [1, d_out]
    return w_t, b_row


def logreg_forward_prepared(x, w_t, b_row, *, apply_sigmoid=False,
                            block_b=4096, input_dtype=None,
                            out_dtype=jnp.float32):
    """z = x @ weight.T + bias using pre-transposed params from prepare_params."""
    B, d_in = x.shape
    d_in_w, d_out = w_t.shape
    assert d_in == d_in_w, (d_in, d_in_w)

    if input_dtype is not None and x.dtype != input_dtype:
        # Optional bf16 input path: halves x HBM read; matmul accumulates f32.
        x = x.astype(input_dtype)

    # Batch tile: big (up to 4096 rows) to amortize the ~0.35 us per-step
    # overhead, but capped at ~ceil(B/2) (multiple of 8) so the "parallel"
    # grid axis always has >=2 steps for v7x's two TensorCores.  Double-
    # buffered per-step VMEM at tb=4096, d_in=32, d_out=16 is well under the
    # scoped default on all generations.
    tb = min(block_b, _round_up(pl.cdiv(B, 2), _SUBLANE))
    tb = max(tb, _SUBLANE)
    grid = (pl.cdiv(B, tb),)

    out = pl.pallas_call(
        functools.partial(_linear_kernel, apply_sigmoid=apply_sigmoid),
        out_shape=jax.ShapeDtypeStruct((B, d_out), out_dtype),
        grid_spec=pltpu.PrefetchScalarGridSpec(
            num_scalar_prefetch=0,
            grid=grid,
            in_specs=[
                # x: streamed per batch tile (double-buffered by the pipeline);
                # last tile may be partial -> Pallas edge-block handling.
                pl.BlockSpec((tb, d_in), lambda i: (i, 0)),
                # weight / bias: constant block index -> stay VMEM-resident.
                pl.BlockSpec((d_in, d_out), lambda i: (0, 0)),
                pl.BlockSpec((1, d_out), lambda i: (0, 0)),
            ],
            # Unpadded output: block last dim == full array last dim (legal),
            # OOB rows of the partial last tile are dropped on store.
            out_specs=pl.BlockSpec((tb, d_out), lambda i: (i, 0)),
        ),
        compiler_params=pltpu.CompilerParams(
            # Batch tiles are independent -> shard across v7x's 2 TensorCores.
            dimension_semantics=("parallel",),
        ),
    )(x, w_t, b_row)

    return out


def logreg_forward(x, weight, bias, **kwargs):
    """Convenience one-shot wrapper taking torch-layout weight [d_out, d_in].
    Prefer prepare_params + logreg_forward_prepared in a real loop so the
    transpose happens once."""
    w_t, b_row = prepare_params(weight, bias)
    return logreg_forward_prepared(x, w_t, b_row, **kwargs)


if __name__ == "__main__":
    # LogReg("logreg", d_in=32, d_out=16) — small synthetic shapes.
    d_in, d_out, batch = 32, 16, 8

    key = jax.random.PRNGKey(0)
    kx, kw, kb, kx2 = jax.random.split(key, 4)

    # torch.nn.Linear-style uniform init bound.
    bound = 1.0 / (d_in ** 0.5)
    weight = jax.random.uniform(kw, (d_out, d_in), jnp.float32, -bound, bound)
    bias = jax.random.uniform(kb, (d_out,), jnp.float32, -bound, bound)

    # Prepare params once (transpose to lane-dense [d_in, d_out]).
    w_t, b_row = prepare_params(weight, bias)

    # Small shipped shape (B=8): single grid step.
    x = jax.random.normal(kx, (batch, d_in), jnp.float32)
    z = logreg_forward_prepared(x, w_t, b_row)
    jax.block_until_ready(z)
    z_ref = x @ weight.T + bias
    assert z.shape == (batch, d_out)
    assert jnp.allclose(z, z_ref, atol=1e-5, rtol=1e-5)

    # Larger batch exercising the multi-step grid AND the partial last tile
    # (B=1000 -> tb=504, grid=2, last tile has 8 OOB rows dropped on store).
    big_batch = 1000
    x2 = jax.random.normal(kx2, (big_batch, d_in), jnp.float32)
    z2 = logreg_forward_prepared(x2, w_t, b_row)
    jax.block_until_ready(z2)
    z2_ref = x2 @ weight.T + bias
    assert z2.shape == (big_batch, d_out)
    assert jnp.allclose(z2, z2_ref, atol=1e-5, rtol=1e-5)

    # Fused-sigmoid path (used when the logistic output is consumed directly).
    p = logreg_forward_prepared(x, w_t, b_row, apply_sigmoid=True)
    jax.block_until_ready(p)
    assert jnp.allclose(p, jax.nn.sigmoid(z_ref), atol=1e-5, rtol=1e-5)

    print("KERNEL_OK")
</pallas_src>

<mosaic_0001>
module attributes {stable_mosaic.version = 11 : i64} {
  func.func @_linear_kernel(%arg0: i32, %arg1: memref<8x32xf32, #tpu.memory_space<vmem>>, %arg2: memref<32x16xf32, #tpu.memory_space<vmem>>, %arg3: memref<1x16xf32, #tpu.memory_space<vmem>>, %arg4: memref<8x16xf32, #tpu.memory_space<vmem>>) attributes {dimension_semantics = [#tpu.dimension_semantics<parallel>], iteration_bounds = array<i64: 1>, scalar_prefetch = 0 : i64, scratch_operands = 0 : i64, tpu.core_type = #tpu.core_type<tc>, window_params = [{transform_indices = @transform_0, window_bounds = array<i64: 8, 32>}, {pipeline_mode = #tpu.pipeline_mode<synchronous>, transform_indices = @transform_1, window_bounds = array<i64: 32, 16>}, {pipeline_mode = #tpu.pipeline_mode<synchronous>, transform_indices = @transform_2, window_bounds = array<i64: 1, 16>}, {transform_indices = @transform_3, window_bounds = array<i64: 8, 16>}]} {
    %c0 = arith.constant 0 : index
    %c0_0 = arith.constant 0 : index
    %0 = vector.load %arg1[%c0, %c0_0] : memref<8x32xf32, #tpu.memory_space<vmem>>, vector<8x32xf32>
    %c0_1 = arith.constant 0 : index
    %c0_2 = arith.constant 0 : index
    %1 = vector.load %arg2[%c0_1, %c0_2] : memref<32x16xf32, #tpu.memory_space<vmem>>, vector<32x16xf32>
    %cst = arith.constant dense<0.000000e+00> : vector<8x16xf32>
    %2 = tpu.matmul %0, %1, %cst {dimension_numbers = #tpu.dot_dimension_numbers<[1], [0], [0], [1], [0, 0, 1, 1], [], []>} : vector<8x32xf32>, vector<32x16xf32>, vector<8x16xf32> -> vector<8x16xf32>
    %c0_3 = arith.constant 0 : index
    %c0_4 = arith.constant 0 : index
    %3 = vector.load %arg3[%c0_3, %c0_4] : memref<1x16xf32, #tpu.memory_space<vmem>>, vector<1x16xf32>
    %4 = vector.broadcast %3 : vector<1x16xf32> to vector<8x16xf32>
    %5 = arith.addf %2, %4 : vector<8x16xf32>
    %c0_5 = arith.constant 0 : index
    %c0_6 = arith.constant 0 : index
    %6 = vector.load %arg4[%c0_5, %c0_6] : memref<8x16xf32, #tpu.memory_space<vmem>>, vector<8x16xf32>
    tpu.vector_store %arg4[%c0_5, %c0_6], %5 {strides = array<i32>} : memref<8x16xf32, #tpu.memory_space<vmem>>, vector<8x16xf32>,
    return
  }
  func.func @transform_0(%arg0: i32) -> (i32, i32) {
    %c0_i32 = arith.constant 0 : i32
    %c0_i32_0 = arith.constant 0 : i32
    return %arg0, %c0_i32 : i32, i32
  }
  func.func @transform_1(%arg0: i32) -> (i32, i32) {
    %c0_i32 = arith.constant 0 : i32
    %c0_i32_0 = arith.constant 0 : i32
    %c0_i32_1 = arith.constant 0 : i32
    return %c0_i32, %c0_i32_0 : i32, i32
  }
  func.func @transform_2(%arg0: i32) -> (i32, i32) {
    %c0_i32 = arith.constant 0 : i32
    %c0_i32_0 = arith.constant 0 : i32
    %c0_i32_1 = arith.constant 0 : i32
    return %c0_i32, %c0_i32_0 : i32, i32
  }
  func.func @transform_3(%arg0: i32) -> (i32, i32) {
    %c0_i32 = arith.constant 0 : i32
    %c0_i32_0 = arith.constant 0 : i32
    return %arg0, %c0_i32 : i32, i32
  }
}

</mosaic_0001>

<llo_original>
// kernel: tpu_custom_call.1
$region0: #{tpu_custom_call.1}
  #allocation0 [shape = 'u32[]', space=smem, size = 0x4, offset = 0x4, fixed_abs, tag = 'smem constant byte address 0x4 - core index']
  #allocation1 [shape = 'u32[144,128]{1,0:T(1,128)}', space=vmem, size = 0x12000, scoped, tag = 'internal scratch']
  %s0 = inlined_call_operand.vmem [shape: f32[8,32], index: 0, kind: input, shape index: {}]
  %s1 = inlined_call_operand.vmem [shape: f32[32,16], index: 1, kind: input, shape index: {}]
  %s2 = inlined_call_operand.vmem [shape: f32[1,16], index: 2, kind: input, shape index: {}]
  %s3 = inlined_call_operand.hbm [shape: f32[8,16], index: 3, kind: output, shape index: {}]
  %s4 = sld [smem:[#allocation0]]
  $region22: #{tpu_custom_call.1} parent=0
    _
  %s6 = ssub.s32 1, %s4
  %s7 = scalar_select 0, %s6, %s4
  $region1: #{tpu_custom_call.1} parent=0
    #allocation2 [shape = 'u8[4096]{0}', space=vmem, size = 0x1000, scoped, tag = 'output window, operand 0, single buffered']
    #allocation3 [shape = 's32[1]{0}', space=sflag, size = 0x4, scoped, tag = 'scoped memory for tpu_custom_call.1']
    %8 = vsyncpa [#allocation3], 0
    // Predicated region
    $region2: #{tpu_custom_call.1} parent=1 // pred_check
      _
    $region3: #{tpu_custom_call.1} parent=1 // pred_check_branch
      %10 = sbr.rel (0) target = $region5
    $region4: #{tpu_custom_call.1} parent=1 // pred_region
      _
    $region5: #{tpu_custom_call.1} parent=1 // pred_fallthru
      _
    // Predicated region
    $region6: #{tpu_custom_call.1} parent=1 // pred_check
      _
    $region7: #{tpu_custom_call.1} parent=1 // pred_check_branch
      %12 = sbr.rel (0) target = $region9
    $region8: #{tpu_custom_call.1} parent=1 // pred_region
      _
    $region9: #{tpu_custom_call.1} parent=1 // pred_fallthru
      _
    // Predicated region
    $region10: #{tpu_custom_call.1} parent=1 // pred_check
      _
    $region11: #{tpu_custom_call.1} parent=1 // pred_check_branch
      %14 = sbr.rel (0) target = $region13
    $region12: #{tpu_custom_call.1} parent=1 // pred_region
      _
    $region13: #{tpu_custom_call.1} parent=1 // pred_fallthru
      _
    %v15 = vld [vmem:[%s0] sm:$0xff]
    %v16 = vld [vmem:[%s1] sm:$0xff]
    %v17 = vld [vmem:[%s1 + $0x8] sm:$0xff]
    %v18 = vld [vmem:[%s1 + $0x10] sm:$0xff]
    %v19 = vld [vmem:[%s1 + $0x18] sm:$0xff]
    %v20 = vld [vmem:[%s2] sm:$0x1]
    %v22 = vlaneseq
    %v23 = vshrl.u32 %v22, 7
    %v24 = vsub.s32 0, %v23
    %v25 = vrot.slane %v20, %v24
    %vm27 = vcmask 261120
    %v29 = vsel %vm27, %v15, 0
    %31 = vmatprep.subr.mxu0 0.0
    %32 = vmatpush1.msra.mxu0 %v16
    %33 = vmatprep.subr.mxu0 0.0
    %34 = vmatpush1.msra.mxu0 %v17
    %35 = vmatprep.subr.mxu0 0.0
    %36 = vmatpush1.msra.mxu0 %v18
    %37 = vmatprep.subr.mxu0 0.0
    %38 = vmatpush1.msra.mxu0 %v19
    %39 = vmatprep.subr.mxu0 0.0
    %40 = vmatpush1.msra.mxu0 0.0
    %41 = vmatprep.subr.mxu0 0.0
    %42 = vmatpush1.msra.mxu0 0.0
    %43 = vmatprep.subr.mxu0 0.0
    %44 = vmatpush1.msra.mxu0 0.0
    %45 = vmatprep.subr.mxu0 0.0
    %46 = vmatpush1.msra.mxu0 0.0
    %47 = vmatprep.subr.mxu0 0.0
    %48 = vmatpush1.msra.mxu0 0.0
    %49 = vmatprep.subr.mxu0 0.0
    %50 = vmatpush1.msra.mxu0 0.0
    %51 = vmatprep.subr.mxu0 0.0
    %52 = vmatpush1.msra.mxu0 0.0
    %53 = vmatprep.subr.mxu0 0.0
    %54 = vmatpush1.msra.mxu0 0.0
    %55 = vmatprep.subr.mxu0 0.0
    %56 = vmatpush1.msra.mxu0 0.0
    %57 = vmatprep.subr.mxu0 0.0
    %58 = vmatpush1.msra.mxu0 0.0
    %59 = vmatprep.subr.mxu0 0.0
    %60 = vmatpush1.msra.mxu0 0.0
    %61 = vmatprep.subr.mxu0 0.0
    %62 = vmatpush1.msra.mxu0 0.0
    %63 = vmatprep.subr.mxu0 0.0
    %64 = vmatpush1.msra.mxu0 0.0
    %65 = vmatprep.subr.mxu0 0.0
    %66 = vmatpush1.msra.mxu0 0.0
    %67 = vmatprep.subr.mxu0 0.0
    %68 = vmatpush1.msra.mxu0 0.0
    %69 = vmatprep.subr.mxu0 0.0
    %70 = vmatpush1.msra.mxu0 0.0
    %71 = vmatprep.subr.mxu0 0.0
    %72 = vmatpush1.msra.mxu0 0.0
    %73 = vmatprep.subr.mxu0 0.0
    %74 = vmatpush1.msra.mxu0 0.0
    %75 = vmatprep.subr.mxu0 0.0
    %76 = vmatpush1.msra.mxu0 0.0
    %77 = vmatprep.subr.mxu0 0.0
    %78 = vmatpush1.msra.mxu0 0.0
    %79 = vmatprep.subr.mxu0 0.0
    %80 = vmatpush1.msra.mxu0 0.0
    %81 = vmatprep.subr.mxu0 0.0
    %82 = vmatpush1.msra.mxu0 0.0
    %83 = vmatprep.subr.mxu0 0.0
    %84 = vmatpush1.msra.mxu0 0.0
    %85 = vmatprep.subr.mxu0 0.0
    %86 = vmatpush1.msra.mxu0 0.0
    %87 = vmatprep.subr.mxu0 0.0
    %88 = vmatpush1.msra.mxu0 0.0
    %89 = vmatprep.subr.mxu0 0.0
    %90 = vmatpush1.msra.mxu0 0.0
    %91 = vmatprep.subr.mxu0 0.0
    %92 = vmatpush1.msra.mxu0 0.0
    %93 = vmatprep.subr.mxu0 0.0
    %94 = vmatpush1.msra.mxu0 0.0
    %95 = vmatprep.mubr.f32.mxu0 0.0
    %96 = vmatmul.mubr.f32.gmra.mrb[0].mxu0 %v29
    %v97 = vpop.f32.mrb[0].mxu0
    %v98 = vadd.f32 %v25, %v97
    %v99 = vpop.f32.mrb[0].mxu0
    %100 = vdwg.mxu0
    %vm101 = vcmask 130048
    %102 = vst.msk [vmem:[#allocation2] sm:$0xff] %vm101, %v98
    // Predicated region
    $region14: #{tpu_custom_call.1} parent=1 // pred_check
      _
    $region15: #{tpu_custom_call.1} parent=1 // pred_check_branch
      %104 = sbr.rel (0) target = $region17
    $region16: #{tpu_custom_call.1} parent=1 // pred_region
      %s106 = ssub.s32 128, 128
      %107 = vsyncadd [#allocation3], %s106
      %s109 = sshll.u32 [#allocation2], 4
      %s110 = int_to_ptr.vmem [resolvable:$true] %s109
      %112 = dma.vmem_to_hbm [thread:$0]  %s110, 128, %s3, [#allocation3]
    $region17: #{tpu_custom_call.1} parent=1 // pred_fallthru
      _
    // Predicated region
    $region18: #{tpu_custom_call.1} parent=1 // pred_check
      _
    $region19: #{tpu_custom_call.1} parent=1 // pred_check_branch
      %114 = sbr.rel (0) target = $region21
    $region20: #{tpu_custom_call.1} parent=1 // pred_region
      %115 = dma.done [#allocation3], 128
    $region21: #{tpu_custom_call.1} parent=1 // pred_fallthru
      _
    %116 = vsyncpa [#allocation3], 1

</llo_original>
